<compile_context>
chip_gen: v5e
topology: v5e:2x2
jax: 0.10.0
libtpu: 0.0.40
codegen_flags: <defaults>
</compile_context>

<pallas_src>
import jax
import jax.numpy as jnp
from jax.experimental import pallas as pl
from jax.experimental.pallas import tpu as pltpu


SUBLANE = 8       # batch tile must be a multiple of this (second-minor dim)
MAX_TB = 2048     # max batch-tile rows per grid step; (2048,30) f32 in +
                  # (2048,2) f32 out double-buffered is well under even v5e's
                  # 16 MiB scoped-VMEM default, so no vmem_limit override needed


def _round_up(n, m):
    return ((n + m - 1) // m) * m


def _choose_batch_tile(b8):
    """Pick the batch tile: as large as possible, but >=2 grid steps when the
    batch allows it (keeps both v7x TensorCores busy via the 'parallel' axis)."""
    if b8 > MAX_TB:
        return MAX_TB
    if b8 >= 2 * SUBLANE:
        return _round_up(-(-b8 // 2), SUBLANE)   # ceil(b8/2) rounded to sublane
    return b8


def _mlp_kernel(x_ref, w1_ref, b1_ref, w2_ref, b2_ref, o_ref):
    # Layer 1: (TB, D) @ (D, H) -> f32 accumulate on the MXU; bias + sigmoid.
    h = jnp.dot(x_ref[...], w1_ref[...], preferred_element_type=jnp.float32)
    h = jax.nn.sigmoid(h + b1_ref[...])           # (TB, H) + (1, H) broadcast
    # Layer 2: (TB, H) @ (H, C) -> f32 accumulate; bias; store f32.
    out = jnp.dot(h, w2_ref[...], preferred_element_type=jnp.float32)
    o_ref[...] = out + b2_ref[...]                # (TB, C) + (1, C) broadcast


def prepare_params(w1, b1, w2, b2):
    """One-time parameter prep (call once, reuse across forward calls).

    Accepts weights already in (in_features, out_features) layout and biases of
    shape (out_features,) or (1, out_features); returns f32 arrays in the
    layout the kernel consumes.  (To import PyTorch nn.Linear weights, pass
    `linear.weight.T`.)
    """
    w1 = jnp.asarray(w1, jnp.float32)
    w2 = jnp.asarray(w2, jnp.float32)
    b1 = jnp.asarray(b1, jnp.float32).reshape(1, -1)
    b2 = jnp.asarray(b2, jnp.float32).reshape(1, -1)
    return w1, b1, w2, b2


def network_forward(x, params):
    """Fused two-layer MLP forward pass in a single Pallas kernel.

    x:      (B, D) float32
    params: (w1 (D, H), b1 (1, H), w2 (H, C), b2 (1, C)) from prepare_params.
    returns (B, C) float32 logits
    """
    w1, b1, w2, b2 = params
    B, D = x.shape
    H = w1.shape[1]
    C = w2.shape[1]

    # Only the batch dim is padded/tiled.
    B8 = _round_up(B, SUBLANE)
    TB = _choose_batch_tile(B8)
    Bp = _round_up(B8, TB)
    grid = (Bp // TB,)

    x_p = x if Bp == B else jnp.pad(x, ((0, Bp - B), (0, 0)))

    cost = pl.CostEstimate(
        flops=2 * Bp * (D * H + H * C),
        transcendentals=Bp * H,                      # sigmoid
        bytes_accessed=(x_p.size + w1.size + w2.size
                        + b1.size + b2.size + Bp * C) * 4,
    )

    out_p = pl.pallas_call(
        _mlp_kernel,
        out_shape=jax.ShapeDtypeStruct((Bp, C), jnp.float32),
        grid_spec=pl.GridSpec(
            grid=grid,
            in_specs=[
                # Batch-tiled input; D is the full array dim (no lane padding).
                pl.BlockSpec((TB, D), lambda i: (i, 0)),
                # Weights / biases: full-dim blocks, constant index_map ->
                # VMEM-resident, DMA'd once.
                pl.BlockSpec((D, H), lambda i: (0, 0)),
                pl.BlockSpec((1, H), lambda i: (0, 0)),
                pl.BlockSpec((H, C), lambda i: (0, 0)),
                pl.BlockSpec((1, C), lambda i: (0, 0)),
            ],
            # Full-dim (unpadded) last axis: tiny masked store, ~64x less
            # HBM writeback than a lane-padded f32 slab.
            out_specs=pl.BlockSpec((TB, C), lambda i: (i, 0)),
        ),
        compiler_params=pltpu.CompilerParams(
            dimension_semantics=("parallel",)),   # batch tiles are independent
        cost_estimate=cost,
    )(x_p, w1, b1, w2, b2)

    # No-op when Bp == B; otherwise strips padded batch rows.
    return out_p[:B]


def _init_linear_params(key, fan_in, fan_out):
    """Deterministic init mimicking PyTorch nn.Linear default U[-1/sqrt(fan_in), ...]."""
    k_w, k_b = jax.random.split(key)
    bound = 1.0 / jnp.sqrt(jnp.float32(fan_in))
    # Stored as (fan_in, fan_out) so the kernel does x @ W directly.
    w = jax.random.uniform(k_w, (fan_in, fan_out), jnp.float32, -bound, bound)
    b = jax.random.uniform(k_b, (1, fan_out), jnp.float32, -bound, bound)
    return w, b


if __name__ == "__main__":
    # Shapes consistent with the module:
    #   wisconsin.csv -> input_dim = 30 features, num_classes = 2, hidden_layers = 64.
    batch = 8
    input_dim = 30
    hidden_layers = 64
    output_dim = 2

    key = jax.random.PRNGKey(0)
    k_x, k_l1, k_l2 = jax.random.split(key, 3)

    # Input features, min-max normalized to [0, 1] like the script does for X.
    x_raw = jax.random.normal(k_x, (batch, input_dim), jnp.float32)
    x = (x_raw - x_raw.min()) / (x_raw.max() - x_raw.min())

    w1, b1 = _init_linear_params(k_l1, input_dim, hidden_layers)
    w2, b2 = _init_linear_params(k_l2, hidden_layers, output_dim)

    # One-time parameter preparation (hoisted out of the forward pass).
    params = prepare_params(w1, b1, w2, b2)

    out = network_forward(x, params)
    out = jax.block_until_ready(out)

    # Reference check in plain JAX f32 (kernel is f32 end-to-end with f32
    # accumulation; tolerance only covers MXU pass / reassociation differences).
    ref = jax.nn.sigmoid(x @ w1 + b1) @ w2 + b2
    assert out.shape == (batch, output_dim)
    assert jnp.allclose(out, ref, atol=1e-2, rtol=1e-2), (
        f"max abs err {jnp.max(jnp.abs(out - ref))}")

    print("KERNEL_OK")
</pallas_src>

<mosaic_0001>
module attributes {stable_mosaic.version = 11 : i64} {
  func.func @_mlp_kernel(%arg0: i32, %arg1: memref<8x30xf32, #tpu.memory_space<vmem>>, %arg2: memref<30x64xf32, #tpu.memory_space<vmem>>, %arg3: memref<1x64xf32, #tpu.memory_space<vmem>>, %arg4: memref<64x2xf32, #tpu.memory_space<vmem>>, %arg5: memref<1x2xf32, #tpu.memory_space<vmem>>, %arg6: memref<8x2xf32, #tpu.memory_space<vmem>>) attributes {dimension_semantics = [#tpu.dimension_semantics<parallel>], iteration_bounds = array<i64: 1>, scalar_prefetch = 0 : i64, scratch_operands = 0 : i64, tpu.core_type = #tpu.core_type<tc>, window_params = [{transform_indices = @transform_0, window_bounds = array<i64: 8, 30>}, {pipeline_mode = #tpu.pipeline_mode<synchronous>, transform_indices = @transform_1, window_bounds = array<i64: 30, 64>}, {pipeline_mode = #tpu.pipeline_mode<synchronous>, transform_indices = @transform_2, window_bounds = array<i64: 1, 64>}, {pipeline_mode = #tpu.pipeline_mode<synchronous>, transform_indices = @transform_3, window_bounds = array<i64: 64, 2>}, {pipeline_mode = #tpu.pipeline_mode<synchronous>, transform_indices = @transform_4, window_bounds = array<i64: 1, 2>}, {transform_indices = @transform_5, window_bounds = array<i64: 8, 2>}]} {
    %c0 = arith.constant 0 : index
    %c0_0 = arith.constant 0 : index
    %0 = vector.load %arg1[%c0, %c0_0] : memref<8x30xf32, #tpu.memory_space<vmem>>, vector<8x30xf32>
    %c0_1 = arith.constant 0 : index
    %c0_2 = arith.constant 0 : index
    %1 = vector.load %arg2[%c0_1, %c0_2] : memref<30x64xf32, #tpu.memory_space<vmem>>, vector<30x64xf32>
    %cst = arith.constant dense<0.000000e+00> : vector<8x64xf32>
    %2 = tpu.matmul %0, %1, %cst {dimension_numbers = #tpu.dot_dimension_numbers<[1], [0], [0], [1], [0, 0, 1, 1], [], []>} : vector<8x30xf32>, vector<30x64xf32>, vector<8x64xf32> -> vector<8x64xf32>
    %c0_3 = arith.constant 0 : index
    %c0_4 = arith.constant 0 : index
    %3 = vector.load %arg3[%c0_3, %c0_4] : memref<1x64xf32, #tpu.memory_space<vmem>>, vector<1x64xf32>
    %4 = vector.broadcast %3 : vector<1x64xf32> to vector<8x64xf32>
    %5 = arith.addf %2, %4 : vector<8x64xf32>
    %6 = arith.negf %5 : vector<8x64xf32>
    %7 = math.exp %6 : vector<8x64xf32>
    %cst_5 = arith.constant 1.000000e+00 : f32
    %8 = vector.broadcast %cst_5 : f32 to vector<8x64xf32>
    %9 = arith.addf %8, %7 : vector<8x64xf32>
    %10 = arith.divf %8, %9 : vector<8x64xf32>
    %c0_6 = arith.constant 0 : index
    %c0_7 = arith.constant 0 : index
    %11 = vector.load %arg4[%c0_6, %c0_7] : memref<64x2xf32, #tpu.memory_space<vmem>>, vector<64x2xf32>
    %cst_8 = arith.constant dense<0.000000e+00> : vector<8x2xf32>
    %12 = tpu.matmul %10, %11, %cst_8 {dimension_numbers = #tpu.dot_dimension_numbers<[1], [0], [0], [1], [0, 0, 1, 1], [], []>} : vector<8x64xf32>, vector<64x2xf32>, vector<8x2xf32> -> vector<8x2xf32>
    %c0_9 = arith.constant 0 : index
    %c0_10 = arith.constant 0 : index
    %13 = vector.load %arg5[%c0_9, %c0_10] : memref<1x2xf32, #tpu.memory_space<vmem>>, vector<1x2xf32>
    %14 = vector.broadcast %13 : vector<1x2xf32> to vector<8x2xf32>
    %15 = arith.addf %12, %14 : vector<8x2xf32>
    %c0_11 = arith.constant 0 : index
    %c0_12 = arith.constant 0 : index
    %16 = vector.load %arg6[%c0_11, %c0_12] : memref<8x2xf32, #tpu.memory_space<vmem>>, vector<8x2xf32>
    tpu.vector_store %arg6[%c0_11, %c0_12], %15 {strides = array<i32>} : memref<8x2xf32, #tpu.memory_space<vmem>>, vector<8x2xf32>,
    return
  }
  func.func @transform_0(%arg0: i32) -> (i32, i32) {
    %c0_i32 = arith.constant 0 : i32
    %c0_i32_0 = arith.constant 0 : i32
    return %arg0, %c0_i32 : i32, i32
  }
  func.func @transform_1(%arg0: i32) -> (i32, i32) {
    %c0_i32 = arith.constant 0 : i32
    %c0_i32_0 = arith.constant 0 : i32
    %c0_i32_1 = arith.constant 0 : i32
    return %c0_i32, %c0_i32_0 : i32, i32
  }
  func.func @transform_2(%arg0: i32) -> (i32, i32) {
    %c0_i32 = arith.constant 0 : i32
    %c0_i32_0 = arith.constant 0 : i32
    %c0_i32_1 = arith.constant 0 : i32
    return %c0_i32, %c0_i32_0 : i32, i32
  }
  func.func @transform_3(%arg0: i32) -> (i32, i32) {
    %c0_i32 = arith.constant 0 : i32
    %c0_i32_0 = arith.constant 0 : i32
    %c0_i32_1 = arith.constant 0 : i32
    return %c0_i32, %c0_i32_0 : i32, i32
  }
  func.func @transform_4(%arg0: i32) -> (i32, i32) {
    %c0_i32 = arith.constant 0 : i32
    %c0_i32_0 = arith.constant 0 : i32
    %c0_i32_1 = arith.constant 0 : i32
    return %c0_i32, %c0_i32_0 : i32, i32
  }
  func.func @transform_5(%arg0: i32) -> (i32, i32) {
    %c0_i32 = arith.constant 0 : i32
    %c0_i32_0 = arith.constant 0 : i32
    return %arg0, %c0_i32 : i32, i32
  }
}

</mosaic_0001>

<llo_original>
// kernel: tpu_custom_call.1
$region0: #{tpu_custom_call.1}
  #allocation0 [shape = 'u32[]', space=smem, size = 0x4, offset = 0x4, fixed_abs, tag = 'smem constant byte address 0x4 - core index']
  #allocation1 [shape = 'u32[72,128]{1,0:T(1,128)}', space=vmem, size = 0x9000, scoped, tag = 'internal scratch']
  %s0 = inlined_call_operand.vmem [shape: f32[8,30], index: 0, kind: input, shape index: {}]
  %s1 = inlined_call_operand.vmem [shape: f32[30,64], index: 1, kind: input, shape index: {}]
  %s2 = inlined_call_operand.vmem [shape: f32[1,64], index: 2, kind: input, shape index: {}]
  %s3 = inlined_call_operand.vmem [shape: f32[64,2], index: 3, kind: input, shape index: {}]
  %s4 = inlined_call_operand.vmem [shape: f32[1,2], index: 4, kind: input, shape index: {}]
  %s5 = inlined_call_operand.vmem [shape: f32[8,2], index: 5, kind: output, shape index: {}]
  %s6 = sld [smem:[#allocation0]]
  $region30: #{tpu_custom_call.1} parent=0
    _
  %s8 = ssub.s32 1, %s6
  %s9 = scalar_select 0, %s8, %s6
  // Predicated region
  $region2: #{tpu_custom_call.1} parent=0 // pred_check
    _
  $region3: #{tpu_custom_call.1} parent=0 // pred_check_branch
    %11 = sbr.rel (0) target = $region5
  $region4: #{tpu_custom_call.1} parent=0 // pred_region
    _
  $region5: #{tpu_custom_call.1} parent=0 // pred_fallthru
    _
  // Predicated region
  $region6: #{tpu_custom_call.1} parent=0 // pred_check
    _
  $region7: #{tpu_custom_call.1} parent=0 // pred_check_branch
    %13 = sbr.rel (0) target = $region9
  $region8: #{tpu_custom_call.1} parent=0 // pred_region
    _
  $region9: #{tpu_custom_call.1} parent=0 // pred_fallthru
    _
  // Predicated region
  $region10: #{tpu_custom_call.1} parent=0 // pred_check
    _
  $region11: #{tpu_custom_call.1} parent=0 // pred_check_branch
    %15 = sbr.rel (0) target = $region13
  $region12: #{tpu_custom_call.1} parent=0 // pred_region
    _
  $region13: #{tpu_custom_call.1} parent=0 // pred_fallthru
    _
  // Predicated region
  $region14: #{tpu_custom_call.1} parent=0 // pred_check
    _
  $region15: #{tpu_custom_call.1} parent=0 // pred_check_branch
    %17 = sbr.rel (0) target = $region17
  $region16: #{tpu_custom_call.1} parent=0 // pred_region
    _
  $region17: #{tpu_custom_call.1} parent=0 // pred_fallthru
    _
  // Predicated region
  $region18: #{tpu_custom_call.1} parent=0 // pred_check
    _
  $region19: #{tpu_custom_call.1} parent=0 // pred_check_branch
    %19 = sbr.rel (0) target = $region21
  $region20: #{tpu_custom_call.1} parent=0 // pred_region
    _
  $region21: #{tpu_custom_call.1} parent=0 // pred_fallthru
    _
  %v20 = vld [vmem:[%s0] sm:$0xff]
  %v21 = vld [vmem:[%s1] sm:$0xff]
  %v22 = vld [vmem:[%s1 + $0x8] sm:$0xff]
  %v23 = vld [vmem:[%s1 + $0x10] sm:$0xff]
  %v24 = vld [vmem:[%s1 + $0x18] sm:$0x3f]
  %v25 = vld [vmem:[%s2] sm:$0x1]
  %v27 = vperm.slane %v25, 0
  %vm29 = vcmask 244736
  %v31 = vsel %vm29, %v20, 0
  %vm33 = vcmask 1045504
  %v35 = vsel %vm33, %v24, 0
  %37 = vmatpush.msra.mxu0 0.0
  %38 = vmatpush.msra.mxu0 0.0
  %39 = vmatpush.msra.mxu0 0.0
  %40 = vmatpush.msra.mxu0 0.0
  %41 = vmatpush.msra.mxu0 0.0
  %42 = vmatpush.msra.mxu0 0.0
  %43 = vmatpush.msra.mxu0 0.0
  %44 = vmatpush.msra.mxu0 0.0
  %45 = vmatpush.msra.mxu0 0.0
  %46 = vmatpush.msra.mxu0 0.0
  %47 = vmatpush.msra.mxu0 0.0
  %48 = vmatpush.msra.mxu0 0.0
  %49 = vmatpush.msra.mxu0 %v35
  %50 = vmatpush.msra.mxu0 %v23
  %51 = vmatpush.msra.mxu0 %v22
  %52 = vmatpush.msra.mxu0 %v21
  %53 = vmatmul.f32.gmra.mxu0 %v31
  %v54 = vpop.f32.mrf.mxu0
  %v55 = vadd.f32 %v27, %v54
  %56 = vdwg.mxu0
  %v57 = vxor.u32 %v55, 2147483648
  %v58 = vmul.f32 %v57, 1.442695
  %v59 = vpow.pop %v58
  %v60 = vadd.f32 %v59, 1.0
  %v61 = vrcp.pop %v60
  %v62 = vmul.f32 %v60, %v61
  %v63 = vsub.f32 1.0, %v62
  %v64 = vmul.f32 %v61, %v63
  %v65 = vadd.f32 %v61, %v64
  %vm66 = vweird.f32 %v60
  %vm67 = vweird.f32 %v61
  %vm68 = vmor %vm66, %vm67
  %v69 = vsel %vm68, %v61, %v65
  %v70 = vand.u32 2147483647, %v60
  %vm71 = vcmp.eq.f32.partialorder %v70, 8.507059e+37
  %v72 = vand.u32 %v60, 2147483648
  %v73 = vor.u32 1.1754944e-38, %v72
  %v74 = vsel %vm71, %v73, %v69
  %v75 = vmul.f32 1.0, %v74
  %v76 = vld [vmem:[%s3] sm:$0xff]
  %v77 = vld [vmem:[%s3 + $0x8] sm:$0xff]
  %v78 = vld [vmem:[%s3 + $0x10] sm:$0xff]
  %v79 = vld [vmem:[%s3 + $0x18] sm:$0xff]
  %v80 = vld [vmem:[%s3 + $0x20] sm:$0xff]
  %v81 = vld [vmem:[%s3 + $0x28] sm:$0xff]
  %v82 = vld [vmem:[%s3 + $0x30] sm:$0xff]
  %v83 = vld [vmem:[%s3 + $0x38] sm:$0xff]
  %v84 = vld [vmem:[%s4] sm:$0x1]
  %v86 = vperm.slane %v84, 0
  %vm88 = vcmask 523264
  %v90 = vsel %vm88, %v75, 0
  %92 = vmatpush.msra.mxu0 0.0
  %93 = vmatpush.msra.mxu0 0.0
  %94 = vmatpush.msra.mxu0 0.0
  %95 = vmatpush.msra.mxu0 0.0
  %96 = vmatpush.msra.mxu0 0.0
  %97 = vmatpush.msra.mxu0 0.0
  %98 = vmatpush.msra.mxu0 0.0
  %99 = vmatpush.msra.mxu0 0.0
  %100 = vmatpush.msra.mxu0 %v83
  %101 = vmatpush.msra.mxu0 %v82
  %102 = vmatpush.msra.mxu0 %v81
  %103 = vmatpush.msra.mxu0 %v80
  %104 = vmatpush.msra.mxu0 %v79
  %105 = vmatpush.msra.mxu0 %v78
  %106 = vmatpush.msra.mxu0 %v77
  %107 = vmatpush.msra.mxu0 %v76
  %108 = vmatmul.f32.gmra.mxu0 %v90
  %v109 = vpop.f32.mrf.mxu0
  %v110 = vadd.f32 %v86, %v109
  %111 = vdwg.mxu0
  %vm112 = vcmask 15360
  %113 = vst.msk [vmem:[%s5] sm:$0xff] %vm112, %v110
  // Predicated region
  $region22: #{tpu_custom_call.1} parent=0 // pred_check
    _
  $region23: #{tpu_custom_call.1} parent=0 // pred_check_branch
    %115 = sbr.rel (0) target = $region25
  $region24: #{tpu_custom_call.1} parent=0 // pred_region
    _
  $region25: #{tpu_custom_call.1} parent=0 // pred_fallthru
    _
  // Predicated region
  $region26: #{tpu_custom_call.1} parent=0 // pred_check
    _
  $region27: #{tpu_custom_call.1} parent=0 // pred_check_branch
    %117 = sbr.rel (0) target = $region29
  $region28: #{tpu_custom_call.1} parent=0 // pred_region
    _
  $region29: #{tpu_custom_call.1} parent=0 // pred_fallthru
    _

</llo_original>
